<compile_context>
chip_gen: v6e
topology: v6e:2x2x1
jax: 0.10.0
libtpu: 0.0.40
codegen_flags: <defaults>
</compile_context>

<pallas_src>
import functools

import jax
import jax.numpy as jnp
import numpy as np
from jax.experimental import pallas as pl
from jax.experimental.pallas import tpu as pltpu


# ------------------------------ helpers ------------------------------------ #

def _round_up(x, m):
    return ((x + m - 1) // m) * m


def _vmem_core_bytes():
    """Per-TensorCore VMEM estimate.

    get_tpu_info() may report per-chip capacity (128 MiB) on 2-TC parts (v7x),
    whose per-core VMEM is only 64 MiB, so clamp to 64 MiB.  This is slightly
    conservative on v5e/v6e (128 MiB/TC) but the 2048-row tile cap means the
    clamp never changes the chosen tile there.
    """
    cap = 64 * 1024 * 1024
    try:
        info = pltpu.get_tpu_info()
        reported = getattr(info, "vmem_capacity_bytes", None)
        if reported:
            cap = min(int(reported), 64 * 1024 * 1024)
    except Exception:
        pass
    return cap


def _num_tensorcores():
    """2 TensorCores per chip on v7x, 1 on v5e/v6e (conservative fallback 1)."""
    try:
        kind = jax.devices()[0].device_kind.lower()
        if "v7" in kind:
            return 2
    except Exception:
        pass
    return 1


def _choose_tile_rows(rows, in_lane, out_lane, in_bytes, out_bytes, num_layers,
                      weight_bytes, vmem_core, num_tc, max_tile_rows=None):
    """Pick the node tile (in folded rows).

    Double-buffered DMA buffers + in-kernel f32 temporaries must fit well inside
    per-core VMEM.  Rows are rounded to the sublane granularity of the streamed
    dtype (8 for 4B, 16 for 2B, 32 for 1B).  The forced multi-step split only
    fires on multi-TC parts (v7x); on 1-TC chips a single grid step is kept when
    everything fits (avoids pure per-step overhead).
    """
    granule = {4: 8, 2: 16, 1: 32}.get(int(in_bytes), 8)
    per_row = (2 * num_layers * in_lane * in_bytes     # xs tile, double buffered
               + 2 * out_lane * out_bytes              # out tile, double buffered
               + 4 * max(in_lane, out_lane) * 4)       # f32 temporaries (1 layer live)
    budget = int(vmem_core * 0.45) - 2 * weight_bytes - (4 << 20)
    t = budget // max(per_row, 1)
    t = max(granule, (min(int(t), 2048) // granule) * granule)
    if max_tile_rows is not None:
        t = max(granule, (min(t, int(max_tile_rows)) // granule) * granule)

    rows_g = _round_up(rows, granule)
    if rows_g <= t:
        if num_tc >= 2 and rows_g >= 256:
            # split across v7x's two TensorCores (dimension_semantics parallel)
            t = _round_up(-(-rows_g // num_tc), granule)
        else:
            t = rows_g          # single grid step on 1-TC parts (v5e / v6e)
    else:
        steps = -(-rows_g // t)
        if num_tc >= 2 and steps < 8 and steps % num_tc != 0:
            # small odd step count leaves one v7x TC with ~2x the work
            steps = _round_up(steps, num_tc)
            t = max(granule, _round_up(-(-rows_g // steps), granule))
    return t


# ------------------------------ kernels ------------------------------------ #

def _simple_agg_kernel(xs_ref, lin_w_ref, lin_b_ref, o_ref, *, mode, num_layers,
                       inv_l):
    """sum / mean / max over layers (per-layer accumulation), relu + linear."""
    agg = xs_ref[0].astype(jnp.float32)                       # [tm, LW]
    for l in range(1, num_layers):                             # L tiny; static unroll
        x = xs_ref[l].astype(jnp.float32)
        agg = jnp.maximum(agg, x) if mode == "max" else agg + x
    if mode == "mean":
        agg = agg * inv_l
    h = jnp.maximum(agg, 0.0)                                  # relu
    out = jnp.dot(h, lin_w_ref[...], preferred_element_type=jnp.float32)
    o_ref[...] = (out + lin_b_ref[...]).astype(o_ref.dtype)


def _cat_agg_kernel(xs_ref, lin_w_ref, lin_b_ref, o_ref, *, num_layers):
    """relu(concat_l xs_l) @ W == sum_l relu(xs_l) @ W_l (relu is elementwise).
    W is pre-split (and block-diag expanded) as [L, LW, LW_out], so each
    per-layer matmul has K = LW (128 when folded) and no weight-ref row slices."""
    acc = jnp.zeros(o_ref.shape, jnp.float32)
    for l in range(num_layers):                                # static unroll
        h = jnp.maximum(xs_ref[l].astype(jnp.float32), 0.0)    # [tm, LW]
        acc = acc + jnp.dot(h, lin_w_ref[l], preferred_element_type=jnp.float32)
    o_ref[...] = (acc + lin_b_ref[...]).astype(o_ref.dtype)


def _att_agg_kernel(xs_ref, att_w_ref, expand_ref, lin_w_ref, lin_b_ref, o_ref,
                    *, num_layers):
    """Lane-dense attention over layers.

    att_w_ref  : [LW, F]   block-diag expansion of the [H,1] scorer
    expand_ref : [F, LW]   kron(eye(F), ones(1,H)) — broadcasts per-node probs
                           back onto their H feature lanes
    The att bias is constant across layers, so it cancels in the layer-softmax
    and is omitted (exact).
    """
    # per-layer scores [tm, F] via one small MXU matmul each (statically unrolled)
    scores = []
    for l in range(num_layers):
        s = jnp.dot(xs_ref[l].astype(jnp.float32), att_w_ref[...],
                    preferred_element_type=jnp.float32)
        scores.append(s)
    m = scores[0]
    for l in range(1, num_layers):
        m = jnp.maximum(m, scores[l])
    es = [jnp.exp(s - m) for s in scores]
    denom = es[0]
    for l in range(1, num_layers):
        denom = denom + es[l]
    inv = 1.0 / denom                     # exact division (HBM-bound; exactness free)

    acc = jnp.zeros(o_ref.shape, jnp.float32)
    for l in range(num_layers):
        p = jnp.dot(es[l] * inv, expand_ref[...],
                    preferred_element_type=jnp.float32)        # [tm, LW]
        acc = acc + xs_ref[l].astype(jnp.float32) * p
    h = jnp.maximum(acc, 0.0)
    out = jnp.dot(h, lin_w_ref[...], preferred_element_type=jnp.float32)
    o_ref[...] = (out + lin_b_ref[...]).astype(o_ref.dtype)


# ------------------------------ wrapper ------------------------------------ #

def la_aggregator_pallas(xs_stack, params, mode, *, stream_dtype=None,
                         max_tile_rows=None):
    """Forward pass of LaAggregator.

    xs_stack : [L, N, H] stacked per-layer node features.
    params   : {'lin_w','lin_b'} (+ {'att_w','att_b'} for mode='att');
               lin_w is [H, H] ([L*H, H] for 'cat'), lin_b is [1, H].
    stream_dtype : optional narrower dtype (e.g. jnp.bfloat16) used only to
               stream xs through HBM (biggest lever on v5e/v6e); accumulation
               stays f32 in-kernel.  Opt-in because it changes numerics ~1e-2.
    """
    if mode not in ("sum", "mean", "max", "att", "cat"):
        # TODO(synk): 'lstm' JumpingKnowledge mode not implemented in Pallas.
        raise NotImplementedError(f"mode {mode!r} not supported")

    L, N, H = xs_stack.shape
    out_dtype = xs_stack.dtype
    if stream_dtype is not None:
        xs_stack = xs_stack.astype(stream_dtype)
    in_bytes = jnp.dtype(xs_stack.dtype).itemsize
    out_bytes = jnp.dtype(out_dtype).itemsize

    lin_w = params["lin_w"].astype(jnp.float32)
    lin_b = params["lin_b"].astype(jnp.float32)
    h_out = lin_w.shape[1]

    # Fold F = 128//H node rows into the lane axis (free row-major reshape) so
    # loads / VPU ops / MXU / stores are lane-dense when H < 128.  Applies to
    # ALL modes (including 'att' via block-diag scorer + expansion matmul).
    fold = (H < 128) and (128 % H == 0) and (h_out == H)
    F = 128 // H if fold else 1
    lane_w = F * H
    out_lane = F * h_out

    eye = jnp.eye(F, dtype=jnp.float32)
    if mode in ("sum", "mean", "max"):
        w_k = jnp.kron(eye, lin_w) if F > 1 else lin_w                 # [FH, FH]
        b_k = jnp.tile(lin_b, (1, F)) if F > 1 else lin_b              # [1, FH]
        weights = [w_k, b_k]
        kernel = functools.partial(_simple_agg_kernel, mode=mode,
                                   num_layers=L, inv_l=1.0 / L)
    elif mode == "cat":
        w_split = lin_w.reshape(L, H, h_out)                           # [L, H, H]
        if F > 1:
            w_k = jnp.einsum("fg,lij->lfigj", eye, w_split).reshape(
                L, F * H, F * h_out)                                   # [L, FH, FH]
            b_k = jnp.tile(lin_b, (1, F))
        else:
            w_k, b_k = w_split, lin_b
        weights = [w_k, b_k]
        kernel = functools.partial(_cat_agg_kernel, num_layers=L)
    else:  # att
        att_w = params["att_w"].astype(jnp.float32).reshape(H, 1)
        if F > 1:
            att_wk = jnp.kron(eye, att_w)                              # [FH, F]
            expand = jnp.kron(eye, jnp.ones((1, H), jnp.float32))      # [F, FH]
            lin_wk = jnp.kron(eye, lin_w)                              # [FH, FH]
            lin_bk = jnp.tile(lin_b, (1, F))
        else:
            att_wk = att_w
            expand = jnp.ones((1, H), jnp.float32)
            lin_wk, lin_bk = lin_w, lin_b
        weights = [att_wk, expand, lin_wk, lin_bk]
        kernel = functools.partial(_att_agg_kernel, num_layers=L)

    weight_bytes = int(sum(int(np.prod(w.shape)) * 4 for w in weights))
    vmem_core = _vmem_core_bytes()
    num_tc = _num_tensorcores()
    rows = -(-N // F)
    tile_rows = _choose_tile_rows(rows, lane_w, out_lane, in_bytes, out_bytes, L,
                                  weight_bytes, vmem_core, num_tc, max_tile_rows)
    tile_nodes = tile_rows * F
    n_pad = _round_up(N, tile_nodes)
    if n_pad != N:
        xs_stack = jnp.pad(xs_stack, ((0, 0), (0, n_pad - N), (0, 0)))
    rows_pad = n_pad // F
    xs_in = xs_stack.reshape(L, rows_pad, lane_w)        # free (row-major) reshape
    grid = (rows_pad // tile_rows,)

    xs_spec = pl.BlockSpec((L, tile_rows, lane_w), lambda i: (0, i, 0))
    out_spec = pl.BlockSpec((tile_rows, out_lane), lambda i: (i, 0))

    def _full_vmem(arr):
        shp = arr.shape
        return pl.BlockSpec(shp, lambda i, _r=len(shp): (0,) * _r)

    in_specs = [xs_spec] + [_full_vmem(w) for w in weights]

    # Advisory cost estimate (mem-bound custom call; helps XLA overlap around it).
    bytes_accessed = (L * rows_pad * lane_w * in_bytes
                      + rows_pad * out_lane * out_bytes + weight_bytes)
    flops = (2 * rows_pad * lane_w * out_lane * (L if mode == "cat" else 1)
             + (L + 2) * rows_pad * lane_w)
    transcendentals = 0
    if mode == "att":
        flops += 4 * L * rows_pad * lane_w * F + 2 * L * rows_pad * lane_w
        transcendentals = L * rows_pad * F
    ce = pl.CostEstimate(flops=int(flops), transcendentals=int(transcendentals),
                         bytes_accessed=int(bytes_accessed))

    cparams = pltpu.CompilerParams(
        dimension_semantics=("parallel",),
        vmem_limit_bytes=int(min(vmem_core * 0.8, 100 << 20)))

    out = pl.pallas_call(
        kernel,
        out_shape=jax.ShapeDtypeStruct((rows_pad, out_lane), out_dtype),
        grid=grid,
        in_specs=in_specs,
        out_specs=out_spec,
        compiler_params=cparams,
        cost_estimate=ce,
    )(xs_in, *weights)

    out = out.reshape(n_pad, h_out)                      # free un-fold
    return out[:N] if n_pad != N else out


# ------------------------------ reference ----------------------------------- #

def la_aggregator_ref(xs_stack, params, mode):
    xs = xs_stack.astype(jnp.float32)
    L, N, H = xs.shape
    if mode == "sum":
        agg = xs.sum(0)
    elif mode == "mean":
        agg = xs.mean(0)
    elif mode == "max":
        agg = xs.max(0)
    elif mode == "att":
        scores = jnp.einsum("lnh,hk->lnk", xs, params["att_w"]) + params["att_b"][0, 0]
        p = jax.nn.softmax(scores, axis=0)
        agg = (xs * p).sum(0)
    elif mode == "cat":
        agg = jnp.transpose(xs, (1, 0, 2)).reshape(N, L * H)
    else:
        raise NotImplementedError(mode)
    out = jnp.maximum(agg, 0.0) @ params["lin_w"].astype(jnp.float32) + params["lin_b"][0]
    return out.astype(xs_stack.dtype)


# ------------------------------ main ----------------------------------------- #

if __name__ == "__main__":
    num_layers, N, hidden = 3, 8, 32          # small shapes consistent with the module

    key = jax.random.PRNGKey(0)
    k_xs, k_lw, k_lb, k_cw, k_cb, k_aw, k_ab = jax.random.split(key, 7)

    # stacked layer features: [L, N, H]
    xs_small = jax.random.normal(k_xs, (num_layers, N, hidden), jnp.float32)
    # larger, ragged node count to exercise padding + multi-step grid
    xs_big = jax.random.normal(jax.random.PRNGKey(1),
                               (num_layers, 300, hidden), jnp.float32)

    # deterministic parameter init (torch Linear-style uniform, [in, out] layout)
    def lin_init(kw, kb, fan_in, fan_out):
        bound = 1.0 / np.sqrt(fan_in)
        w = jax.random.uniform(kw, (fan_in, fan_out), jnp.float32, -bound, bound)
        b = jax.random.uniform(kb, (1, fan_out), jnp.float32, -bound, bound)
        return w, b

    lin_w, lin_b = lin_init(k_lw, k_lb, hidden, hidden)                  # sum/mean/max/att
    cat_w, cat_b = lin_init(k_cw, k_cb, hidden * num_layers, hidden)     # cat
    att_w, att_b = lin_init(k_aw, k_ab, hidden, 1)                       # att scorer

    base_params = {"lin_w": lin_w, "lin_b": lin_b, "att_w": att_w, "att_b": att_b}
    cat_params = {"lin_w": cat_w, "lin_b": cat_b}

    for mode in ("sum", "mean", "max", "att", "cat"):
        params = cat_params if mode == "cat" else base_params
        tol = 1e-4 if mode == "att" else 2e-5

        out = jax.block_until_ready(la_aggregator_pallas(xs_small, params, mode))
        ref = la_aggregator_ref(xs_small, params, mode)
        np.testing.assert_allclose(np.asarray(out), np.asarray(ref), rtol=tol, atol=tol)

        out = jax.block_until_ready(
            la_aggregator_pallas(xs_big, params, mode, max_tile_rows=16))
        ref = la_aggregator_ref(xs_big, params, mode)
        np.testing.assert_allclose(np.asarray(out), np.asarray(ref), rtol=tol, atol=tol)

    # bf16-streamed xs (halves the dominant HBM read); accumulation stays f32.
    out = jax.block_until_ready(
        la_aggregator_pallas(xs_big, base_params, "sum", stream_dtype=jnp.bfloat16))
    ref = la_aggregator_ref(xs_big.astype(jnp.bfloat16).astype(jnp.float32),
                            base_params, "sum")
    np.testing.assert_allclose(np.asarray(out), np.asarray(ref), rtol=2e-2, atol=2e-2)

    print("KERNEL_OK")
</pallas_src>

<mosaic_0001>
module attributes {stable_mosaic.version = 11 : i64} {
  func.func @_simple_agg_kernel(%arg0: i32, %arg1: memref<3x8x128xf32, #tpu.memory_space<vmem>>, %arg2: memref<128x128xf32, #tpu.memory_space<vmem>>, %arg3: memref<1x128xf32, #tpu.memory_space<vmem>>, %arg4: memref<8x128xf32, #tpu.memory_space<vmem>>) attributes {dimension_semantics = [#tpu.dimension_semantics<parallel>], iteration_bounds = array<i64: 1>, scalar_prefetch = 0 : i64, scratch_operands = 0 : i64, tpu.core_type = #tpu.core_type<tc>, window_params = [{transform_indices = @transform_0, window_bounds = array<i64: 3, 8, 128>}, {pipeline_mode = #tpu.pipeline_mode<synchronous>, transform_indices = @transform_1, window_bounds = array<i64: 128, 128>}, {pipeline_mode = #tpu.pipeline_mode<synchronous>, transform_indices = @transform_2, window_bounds = array<i64: 1, 128>}, {transform_indices = @transform_3, window_bounds = array<i64: 8, 128>}]} {
    %c0 = arith.constant 0 : index
    %c0_0 = arith.constant 0 : index
    %c0_1 = arith.constant 0 : index
    %0 = vector.load %arg1[%c0, %c0_0, %c0_1] : memref<3x8x128xf32, #tpu.memory_space<vmem>>, vector<1x8x128xf32>
    %1 = vector.shape_cast %0 : vector<1x8x128xf32> to vector<8x128xf32>
    %c1 = arith.constant 1 : index
    %c0_2 = arith.constant 0 : index
    %c0_3 = arith.constant 0 : index
    %2 = vector.load %arg1[%c1, %c0_2, %c0_3] : memref<3x8x128xf32, #tpu.memory_space<vmem>>, vector<1x8x128xf32>
    %3 = vector.shape_cast %2 : vector<1x8x128xf32> to vector<8x128xf32>
    %4 = arith.addf %1, %3 : vector<8x128xf32>
    %c2 = arith.constant 2 : index
    %c0_4 = arith.constant 0 : index
    %c0_5 = arith.constant 0 : index
    %5 = vector.load %arg1[%c2, %c0_4, %c0_5] : memref<3x8x128xf32, #tpu.memory_space<vmem>>, vector<1x8x128xf32>
    %6 = vector.shape_cast %5 : vector<1x8x128xf32> to vector<8x128xf32>
    %7 = arith.addf %4, %6 : vector<8x128xf32>
    %cst = arith.constant 0.000000e+00 : f32
    %8 = vector.broadcast %cst : f32 to vector<8x128xf32>
    %9 = arith.maximumf %7, %8 : vector<8x128xf32>
    %c0_6 = arith.constant 0 : index
    %c0_7 = arith.constant 0 : index
    %10 = vector.load %arg2[%c0_6, %c0_7] : memref<128x128xf32, #tpu.memory_space<vmem>>, vector<128x128xf32>
    %cst_8 = arith.constant dense<0.000000e+00> : vector<8x128xf32>
    %11 = tpu.matmul %9, %10, %cst_8 {dimension_numbers = #tpu.dot_dimension_numbers<[1], [0], [0], [1], [0, 0, 1, 1], [], []>} : vector<8x128xf32>, vector<128x128xf32>, vector<8x128xf32> -> vector<8x128xf32>
    %c0_9 = arith.constant 0 : index
    %c0_10 = arith.constant 0 : index
    %12 = vector.load %arg3[%c0_9, %c0_10] : memref<1x128xf32, #tpu.memory_space<vmem>>, vector<1x128xf32>
    %13 = vector.broadcast %12 : vector<1x128xf32> to vector<8x128xf32>
    %14 = arith.addf %11, %13 : vector<8x128xf32>
    %c0_11 = arith.constant 0 : index
    %c0_12 = arith.constant 0 : index
    %15 = vector.load %arg4[%c0_11, %c0_12] : memref<8x128xf32, #tpu.memory_space<vmem>>, vector<8x128xf32>
    tpu.vector_store %arg4[%c0_11, %c0_12], %14 {strides = array<i32>} : memref<8x128xf32, #tpu.memory_space<vmem>>, vector<8x128xf32>,
    return
  }
  func.func @transform_0(%arg0: i32) -> (i32, i32, i32) {
    %c0_i32 = arith.constant 0 : i32
    %c0_i32_0 = arith.constant 0 : i32
    %c0_i32_1 = arith.constant 0 : i32
    return %c0_i32, %arg0, %c0_i32_0 : i32, i32, i32
  }
  func.func @transform_1(%arg0: i32) -> (i32, i32) {
    %c0_i32 = arith.constant 0 : i32
    %c0_i32_0 = arith.constant 0 : i32
    %c0_i32_1 = arith.constant 0 : i32
    return %c0_i32, %c0_i32_0 : i32, i32
  }
  func.func @transform_2(%arg0: i32) -> (i32, i32) {
    %c0_i32 = arith.constant 0 : i32
    %c0_i32_0 = arith.constant 0 : i32
    %c0_i32_1 = arith.constant 0 : i32
    return %c0_i32, %c0_i32_0 : i32, i32
  }
  func.func @transform_3(%arg0: i32) -> (i32, i32) {
    %c0_i32 = arith.constant 0 : i32
    %c0_i32_0 = arith.constant 0 : i32
    return %arg0, %c0_i32 : i32, i32
  }
}

</mosaic_0001>

<llo_original>
// kernel: tpu_custom_call.1
$region0: #{tpu_custom_call.1}
  #allocation0 [shape = 'u32[]', space=smem, size = 0x4, offset = 0x4, fixed_abs, tag = 'smem constant byte address 0x4 - core index']
  #allocation1 [shape = 'u32[144,128]{1,0:T(1,128)}', space=vmem, size = 0x12000, scoped, tag = 'internal scratch']
  %s0 = inlined_call_operand.hbm [shape: f32[3,8,128], index: 0, kind: input, shape index: {}]
  %s1 = inlined_call_operand.hbm [shape: f32[128,128], index: 1, kind: input, shape index: {}]
  %s2 = inlined_call_operand.vmem [shape: f32[1,128], index: 2, kind: input, shape index: {}]
  %s3 = inlined_call_operand.hbm [shape: f32[8,128], index: 3, kind: output, shape index: {}]
  %s4 = sld [smem:[#allocation0]]
  $region30: #{tpu_custom_call.1} parent=0
    _
  %s6 = ssub.s32 1, %s4
  %s7 = scalar_select 0, %s6, %s4
  $region1: #{tpu_custom_call.1} parent=0
    #allocation2 [shape = 'u8[12288]{0}', space=vmem, size = 0x3000, scoped, tag = 'input window, operand 0, single buffered']
    #allocation3 [shape = 's32[1]{0}', space=sflag, size = 0x4, scoped, tag = 'scoped memory for tpu_custom_call.1']
    #allocation4 [shape = 's32[1]{0}', space=sflag, size = 0x4, scoped, tag = 'scoped memory for tpu_custom_call.1']
    #allocation5 [shape = 'u8[65536]{0}', space=vmem, size = 0x10000, scoped, tag = 'input window, operand 1, single buffered']
    #allocation6 [shape = 's32[1]{0}', space=sflag, size = 0x4, scoped, tag = 'scoped memory for tpu_custom_call.1']
    #allocation7 [shape = 'u8[4096]{0}', space=vmem, size = 0x1000, scoped, tag = 'output window, operand 0, single buffered']
    %8 = vsyncpa [#allocation3], 0
    %9 = vsyncpa [#allocation6], 0
    %10 = vsyncpa [#allocation4], 0
    // Predicated region
    $region2: #{tpu_custom_call.1} parent=1 // pred_check
      _
    $region3: #{tpu_custom_call.1} parent=1 // pred_check_branch
      %12 = sbr.rel (0) target = $region5
    $region4: #{tpu_custom_call.1} parent=1 // pred_region
      %s14 = ssub.s32 384, 384
      %15 = vsyncadd [#allocation3], %s14
      %s16 = sshll.u32 [#allocation2], 4
      %s17 = int_to_ptr.vmem [resolvable:$true] %s16
      %22 = dma.hbm_to_vmem [thread:$0]  %s0, 384, %s17, [#allocation3], 128, 128, 8
    $region5: #{tpu_custom_call.1} parent=1 // pred_fallthru
      _
    // Predicated region
    $region6: #{tpu_custom_call.1} parent=1 // pred_check
      _
    $region7: #{tpu_custom_call.1} parent=1 // pred_check_branch
      %24 = sbr.rel (0) target = $region9
    $region8: #{tpu_custom_call.1} parent=1 // pred_region
      %s26 = ssub.s32 2048, 2048
      %27 = vsyncadd [#allocation6], %s26
      %s28 = sshll.u32 [#allocation5], 4
      %s29 = int_to_ptr.vmem [resolvable:$true] %s28
      %34 = dma.hbm_to_vmem [thread:$0]  %s1, 2048, %s29, [#allocation6], 128, 128, 8
    $region9: #{tpu_custom_call.1} parent=1 // pred_fallthru
      _
    // Predicated region
    $region10: #{tpu_custom_call.1} parent=1 // pred_check
      _
    $region11: #{tpu_custom_call.1} parent=1 // pred_check_branch
      %36 = sbr.rel (0) target = $region13
    $region12: #{tpu_custom_call.1} parent=1 // pred_region
      _
    $region13: #{tpu_custom_call.1} parent=1 // pred_fallthru
      _
    // Predicated region
    $region14: #{tpu_custom_call.1} parent=1 // pred_check
      _
    $region15: #{tpu_custom_call.1} parent=1 // pred_check_branch
      %38 = sbr.rel (0) target = $region17
    $region16: #{tpu_custom_call.1} parent=1 // pred_region
      %39 = dma.done [#allocation3], 384
    $region17: #{tpu_custom_call.1} parent=1 // pred_fallthru
      _
    // Predicated region
    $region18: #{tpu_custom_call.1} parent=1 // pred_check
      _
    $region19: #{tpu_custom_call.1} parent=1 // pred_check_branch
      %41 = sbr.rel (0) target = $region21
    $region20: #{tpu_custom_call.1} parent=1 // pred_region
      %42 = dma.done [#allocation6], 2048
    $region21: #{tpu_custom_call.1} parent=1 // pred_fallthru
      _
    %v43 = vld [vmem:[#allocation2] sm:$0xff]
    %s44 = scalar_lea.vmem [#allocation2], 8
    %v45 = vld [vmem:[%s44] sm:$0xff]
    %v46 = vadd.f32 %v43, %v45
    %s47 = scalar_lea.vmem [#allocation2], 16
    %v48 = vld [vmem:[%s47] sm:$0xff]
    %v49 = vadd.f32 %v46, %v48
    %v50 = vmax.f32 %v49, 0.0
    %v51 = vld [vmem:[#allocation5] sm:$0xff]
    %v52 = vld [vmem:[#allocation5 + $0x8] sm:$0xff]
    %v53 = vld [vmem:[#allocation5 + $0x10] sm:$0xff]
    %v54 = vld [vmem:[#allocation5 + $0x18] sm:$0xff]
    %v55 = vld [vmem:[#allocation5 + $0x20] sm:$0xff]
    %v56 = vld [vmem:[#allocation5 + $0x28] sm:$0xff]
    %v57 = vld [vmem:[#allocation5 + $0x30] sm:$0xff]
    %v58 = vld [vmem:[#allocation5 + $0x38] sm:$0xff]
    %v59 = vld [vmem:[#allocation5 + $0x40] sm:$0xff]
    %v60 = vld [vmem:[#allocation5 + $0x48] sm:$0xff]
    %v61 = vld [vmem:[#allocation5 + $0x50] sm:$0xff]
    %v62 = vld [vmem:[#allocation5 + $0x58] sm:$0xff]
    %v63 = vld [vmem:[#allocation5 + $0x60] sm:$0xff]
    %v64 = vld [vmem:[#allocation5 + $0x68] sm:$0xff]
    %v65 = vld [vmem:[#allocation5 + $0x70] sm:$0xff]
    %v66 = vld [vmem:[#allocation5 + $0x78] sm:$0xff]
    %v67 = vld [vmem:[%s2] sm:$0x1]
    %v69 = vlaneseq
    %v70 = vshrl.u32 %v69, 7
    %v71 = vsub.s32 0, %v70
    %v72 = vrot.slane %v67, %v71
    %74 = vmatprep.subr.mxu0 0.0
    %75 = vmatpush1.msra.mxu0 %v66
    %76 = vmatprep.subr.mxu0 0.0
    %77 = vmatpush1.msra.mxu0 %v65
    %78 = vmatprep.subr.mxu0 0.0
    %79 = vmatpush1.msra.mxu0 %v64
    %80 = vmatprep.subr.mxu0 0.0
    %81 = vmatpush1.msra.mxu0 %v63
    %82 = vmatprep.subr.mxu0 0.0
    %83 = vmatpush1.msra.mxu0 %v62
    %84 = vmatprep.subr.mxu0 0.0
    %85 = vmatpush1.msra.mxu0 %v61
    %86 = vmatprep.subr.mxu0 0.0
    %87 = vmatpush1.msra.mxu0 %v60
    %88 = vmatprep.subr.mxu0 0.0
    %89 = vmatpush1.msra.mxu0 %v59
    %90 = vmatprep.subr.mxu0 0.0
    %91 = vmatpush1.msra.mxu0 %v58
    %92 = vmatprep.subr.mxu0 0.0
    %93 = vmatpush1.msra.mxu0 %v57
    %94 = vmatprep.subr.mxu0 0.0
    %95 = vmatpush1.msra.mxu0 %v56
    %96 = vmatprep.subr.mxu0 0.0
    %97 = vmatpush1.msra.mxu0 %v55
    %98 = vmatprep.subr.mxu0 0.0
    %99 = vmatpush1.msra.mxu0 %v54
    %100 = vmatprep.subr.mxu0 0.0
    %101 = vmatpush1.msra.mxu0 %v53
    %102 = vmatprep.subr.mxu0 0.0
    %103 = vmatpush1.msra.mxu0 %v52
    %104 = vmatprep.subr.mxu0 0.0
    %105 = vmatpush1.msra.mxu0 %v51
    %106 = vmatprep.subr.mxu0 0.0
    %107 = vmatpush2.msra.mxu0 0.0
    %108 = vmatprep.subr.mxu0 0.0
    %109 = vmatpush2.msra.mxu0 0.0
    %110 = vmatprep.subr.mxu0 0.0
    %111 = vmatpush2.msra.mxu0 0.0
    %112 = vmatprep.subr.mxu0 0.0
    %113 = vmatpush2.msra.mxu0 0.0
    %114 = vmatprep.subr.mxu0 0.0
    %115 = vmatpush2.msra.mxu0 0.0
    %116 = vmatprep.subr.mxu0 0.0
    %117 = vmatpush2.msra.mxu0 0.0
    %118 = vmatprep.subr.mxu0 0.0
    %119 = vmatpush2.msra.mxu0 0.0
    %120 = vmatprep.subr.mxu0 0.0
    %121 = vmatpush2.msra.mxu0 0.0
    %122 = vmatprep.subr.mxu0 0.0
    %123 = vmatpush2.msra.mxu0 0.0
    %124 = vmatprep.subr.mxu0 0.0
    %125 = vmatpush2.msra.mxu0 0.0
    %126 = vmatprep.subr.mxu0 0.0
    %127 = vmatpush2.msra.mxu0 0.0
    %128 = vmatprep.subr.mxu0 0.0
    %129 = vmatpush2.msra.mxu0 0.0
    %130 = vmatprep.subr.mxu0 0.0
    %131 = vmatpush2.msra.mxu0 0.0
    %132 = vmatprep.subr.mxu0 0.0
    %133 = vmatpush2.msra.mxu0 0.0
    %134 = vmatprep.subr.mxu0 0.0
    %135 = vmatpush2.msra.mxu0 0.0
    %136 = vmatprep.subr.mxu0 0.0
    %137 = vmatpush2.msra.mxu0 0.0
    %138 = vmatprep.mubr.f32.mxu0 0.0
    %139 = vmatmul.mubr.f32.gmra.mxu0 %v50
    %v140 = vpop.f32.mrf.mxu0
    %v141 = vadd.f32 %v72, %v140
    %v142 = vpop.f32.mrf.mxu0
    %143 = vdwg.mxu0
    %144 = vst [vmem:[#allocation7] sm:$0xff] %v141
    // Predicated region
    $region22: #{tpu_custom_call.1} parent=1 // pred_check
      _
    $region23: #{tpu_custom_call.1} parent=1 // pred_check_branch
      %146 = sbr.rel (0) target = $region25
    $region24: #{tpu_custom_call.1} parent=1 // pred_region
      %s148 = ssub.s32 128, 128
      %149 = vsyncadd [#allocation4], %s148
      %s151 = sshll.u32 [#allocation7], 4
      %s152 = int_to_ptr.vmem [resolvable:$true] %s151
      %154 = dma.vmem_to_hbm [thread:$0]  %s152, 128, %s3, [#allocation4]
    $region25: #{tpu_custom_call.1} parent=1 // pred_fallthru
      _
    // Predicated region
    $region26: #{tpu_custom_call.1} parent=1 // pred_check
      _
    $region27: #{tpu_custom_call.1} parent=1 // pred_check_branch
      %156 = sbr.rel (0) target = $region29
    $region28: #{tpu_custom_call.1} parent=1 // pred_region
      %157 = dma.done [#allocation4], 128
    $region29: #{tpu_custom_call.1} parent=1 // pred_fallthru
      _
    %158 = vsyncpa [#allocation3], 1
    %159 = vsyncpa [#allocation6], 1
    %160 = vsyncpa [#allocation4], 1

</llo_original>
